<compile_context>
chip_gen: v5e
topology: v5e:2x2
jax: 0.10.0
libtpu: 0.0.40
codegen_flags: <defaults>
</compile_context>

<pallas_src>
import math

import jax
import jax.numpy as jnp
from jax.experimental import pallas as pl
from jax.experimental.pallas import tpu as pltpu


# ----------------------------- kernel bodies ------------------------------ #

def _attn_agg_body(x_ref, mask_ref, wq_ref, wvt_ref, bv_ref, o_ref):
    # x_ref:    (TB, N, D)   node embeddings (native dtype, streamed from HBM)
    # mask_ref: (TB, N, 1)   int32 validity mask (1 = valid node), or None
    # wq_ref:   (1, 1, D)    f32, (query @ Wk) * 1/sqrt(D)  (key proj. folded in)
    # wvt_ref:  (D, D)       value projection weight, pre-transposed to (in, out)
    # bv_ref:   (1, D)       f32 value projection bias
    # o_ref:    (TB, D)      aggregated embeddings for this batch tile
    xf = x_ref[...].astype(jnp.float32)                          # (TB, N, D)

    # Attention scores on the VPU: elementwise mul + lane reduction (no matmul).
    scores = jnp.sum(xf * wq_ref[...], axis=-1, keepdims=True)   # (TB, N, 1)

    if mask_ref is not None:
        valid = mask_ref[...] != 0                               # (TB, N, 1) bool
        scores = jnp.where(valid, scores, -jnp.inf)

    # Numerically safe masked softmax over the node axis, with an explicit
    # fully-masked-row guard (matches torch softmax + nan_to_num -> zeros).
    m = jnp.max(scores, axis=1, keepdims=True)                   # (TB, 1, 1)
    m_safe = jnp.where(m == -jnp.inf, 0.0, m)
    e = jnp.exp(scores - m_safe)                                 # 0 at masked slots
    denom = jnp.sum(e, axis=1, keepdims=True)                    # (TB, 1, 1)
    inv = jnp.where(denom > 0.0, pl.reciprocal(denom, approx=False), 0.0)
    weights = e * inv                                            # (TB, N, 1)

    # Pool x first (broadcast mul + sublane reduce), then one value projection
    # per batch item:  out = pooled @ Wv^T + bv * sum(weights).
    pooled = jnp.sum(weights * xf, axis=1)                       # (TB, D), f32
    sum_w = jnp.where(denom[:, 0, :] > 0.0, 1.0, 0.0)            # (TB, 1): 1, or 0 if fully masked
    out = jnp.dot(pooled.astype(wvt_ref.dtype), wvt_ref[...],
                  preferred_element_type=jnp.float32)            # (TB, D)
    out = out + bv_ref[...] * sum_w
    o_ref[...] = out.astype(o_ref.dtype)


def _attn_agg_kernel_masked(x_ref, mask_ref, wq_ref, wvt_ref, bv_ref, o_ref):
    _attn_agg_body(x_ref, mask_ref, wq_ref, wvt_ref, bv_ref, o_ref)


def _attn_agg_kernel_nomask(x_ref, wq_ref, wvt_ref, bv_ref, o_ref):
    _attn_agg_body(x_ref, None, wq_ref, wvt_ref, bv_ref, o_ref)


# ----------------------------- host wrapper ------------------------------- #

def _vmem_capacity_bytes():
    try:
        cap = getattr(pltpu.get_tpu_info(), "vmem_capacity_bytes", None)
        if cap:
            return int(cap)
    except Exception:
        pass
    return 64 * 1024 * 1024                      # conservative (v7x-sized) fallback


def _has_multiple_tensorcores():
    # Only v7x-class chips expose 2 TensorCores to one program; v5e/v6e have 1.
    try:
        return "7" in jax.devices()[0].device_kind.lower()
    except Exception:
        return False


def attention_aggregator(node_embeddings, query, wk, bk, wv, bv, mask=None,
                         *, block_b=None, compute_dtype=None):
    """Pallas implementation of AttentionAggregator.forward.

    node_embeddings: (B, N, D) or (N, D), any float dtype (f32/bf16), streamed as-is.
    query: (1, D).  wk, wv: (D, D) torch Linear weights (out, in).  bk, bv: (D,).
    mask:  (B, N) bool/int/float or None.  A 2-D input ignores the mask (as in torch).
    compute_dtype: dtype of the Wv MXU operand (defaults to x's dtype); softmax
        math and accumulation are always f32.
    Returns (B, D) for batched input, (D,) for a single (N, D) sample.
    """
    node_embeddings = jnp.asarray(node_embeddings)
    single = node_embeddings.ndim == 2
    if single:
        node_embeddings = node_embeddings[None]                  # (1, N, D)
        mask = None                                              # _forward_single ignores mask

    B, N, D = node_embeddings.shape
    scale = 1.0 / math.sqrt(D)
    x_dtype = node_embeddings.dtype
    mxu_dtype = jnp.dtype(compute_dtype) if compute_dtype is not None else x_dtype

    # Fold the key projection into the query (softmax is shift-invariant, so the
    # query . bk constant drops out entirely -- bk is unused), pre-scaled by 1/sqrt(D).
    q32 = jnp.asarray(query).reshape(1, D).astype(jnp.float32)
    wq = ((q32 @ jnp.asarray(wk).astype(jnp.float32)) * scale).reshape(1, 1, D)
    wvt = jnp.asarray(wv).T.astype(mxu_dtype)                    # (D, D), (in, out)
    bv_p = jnp.asarray(bv).reshape(1, D).astype(jnp.float32)
    del bk  # cancels under softmax shift-invariance

    # ---- Batch-tile selection (generation-aware VMEM budget) -------------- #
    vmem_cap = _vmem_capacity_bytes()
    vmem_limit = int(min(vmem_cap * 3 // 4, 96 * 1024 * 1024))   # ~48 MiB v7x, 96 MiB v5e/v6e

    if block_b is not None:
        tb = int(block_b)
    else:
        x_bytes = jnp.dtype(x_dtype).itemsize
        # Per batch item: double-buffered x tile + ~2 tile-sized f32 temporaries
        # (f32 upcast, weighted product) + double-buffered int32 mask tile.
        per_item = N * D * (2 * x_bytes + 2 * 4)
        if mask is not None:
            per_item += 2 * N * 4
        const_bytes = 2 * D * D * jnp.dtype(mxu_dtype).itemsize + 8 * D * 4
        budget = max(vmem_limit - const_bytes - (2 << 20), 1 << 20)
        tb = max(1, budget // per_item)
        if _has_multiple_tensorcores() and B > 1:
            tb = min(tb, pl.cdiv(B, 2))      # >=2 grid steps so the parallel axis shards over 2 TCs
    if tb >= B:
        tb = B
    else:
        # Output block is (tb, D): since D stays unpadded, the second-to-last
        # block dim must be a multiple of 8 (or equal B).
        tb = min(max(8, (tb // 8) * 8), B)
    grid = (pl.cdiv(B, tb),)

    # ---- BlockSpecs: x/mask unpadded, last dims equal the full array dims ---- #
    in_specs = [pl.BlockSpec((tb, N, D), lambda b: (b, 0, 0))]   # node embeddings
    inputs = [node_embeddings]
    if mask is not None:
        mask_p = (jnp.asarray(mask) != 0).astype(jnp.int32).reshape(B, N, 1)
        in_specs.append(pl.BlockSpec((tb, N, 1), lambda b: (b, 0, 0)))
        inputs.append(mask_p)
    in_specs += [
        pl.BlockSpec((1, 1, D), lambda b: (0, 0, 0)),            # wq (folded key proj., pre-scaled)
        pl.BlockSpec((D, D), lambda b: (0, 0)),                  # Wv^T (constant across grid)
        pl.BlockSpec((1, D), lambda b: (0, 0)),                  # bv
    ]
    inputs += [wq, wvt, bv_p]

    kernel = _attn_agg_kernel_masked if mask is not None else _attn_agg_kernel_nomask

    out = pl.pallas_call(
        kernel,
        out_shape=jax.ShapeDtypeStruct((B, D), x_dtype),
        grid_spec=pltpu.PrefetchScalarGridSpec(
            num_scalar_prefetch=0,
            grid=grid,
            in_specs=in_specs,
            out_specs=pl.BlockSpec((tb, D), lambda b: (b, 0)),
        ),
        compiler_params=pltpu.CompilerParams(
            dimension_semantics=("parallel",),
            vmem_limit_bytes=vmem_limit,
        ),
    )(*inputs)

    return out[0] if single else out                             # (D,) or (B, D)


# ----------------------------- test harness ------------------------------- #

def _xavier_normal(key, shape):
    fan_out, fan_in = shape
    std = math.sqrt(2.0 / (fan_in + fan_out))
    return std * jax.random.normal(key, shape, dtype=jnp.float32)


def _reference(x, query, wk, bk, wv, bv, mask):
    # Pure-JAX mirror of the PyTorch batched forward (softmax + nan_to_num).
    D = x.shape[-1]
    keys = x @ wk.T + bk
    values = x @ wv.T + bv
    scores = jnp.einsum('d,bnd->bn', query[0], keys) / math.sqrt(D)
    scores = jnp.where(mask, scores, -jnp.inf)
    m = jnp.max(scores, axis=-1, keepdims=True)
    e = jnp.exp(scores - m)
    w = e / jnp.sum(e, axis=-1, keepdims=True)
    w = jnp.nan_to_num(w, nan=0.0)
    return jnp.einsum('bn,bnd->bd', w, values)


if __name__ == "__main__":
    B, N, D = 16, 8, 32

    key = jax.random.PRNGKey(0)
    k_x, k_q, k_wk, k_wv, k_bk, k_bv = jax.random.split(key, 6)

    # xavier_normal parameters as in __init__; biases are zero at init, but use
    # small non-zero biases here to also exercise the folded-bias (bv * sum_w)
    # and dropped (q . bk) paths of the restructured kernel.
    query = _xavier_normal(k_q, (1, D))
    wk = _xavier_normal(k_wk, (D, D))
    wv = _xavier_normal(k_wv, (D, D))
    bk = 0.1 * jax.random.normal(k_bk, (D,), dtype=jnp.float32)
    bv = 0.1 * jax.random.normal(k_bv, (D,), dtype=jnp.float32)

    x = jax.random.normal(k_x, (B, N, D), dtype=jnp.float32)

    # Mask: item 1 has its last 3 nodes padded; item 2 is fully masked
    # (exercises the nan_to_num / zero-output guard path).
    mask = jnp.ones((B, N), dtype=bool)
    mask = mask.at[1, N - 3:].set(False)
    mask = mask.at[2, :].set(False)

    out = attention_aggregator(x, query, wk, bk, wv, bv, mask)
    out = jax.block_until_ready(out)
    ref = _reference(x, query, wk, bk, wv, bv, mask)
    assert out.shape == (B, D)
    assert jnp.allclose(out, ref, atol=5e-5, rtol=5e-5), \
        float(jnp.max(jnp.abs(out - ref)))

    # Batched path with mask=None (no mask DMA stream at all).
    out_nm = attention_aggregator(x, query, wk, bk, wv, bv)
    out_nm = jax.block_until_ready(out_nm)
    ref_nm = _reference(x, query, wk, bk, wv, bv, jnp.ones((B, N), dtype=bool))
    assert jnp.allclose(out_nm, ref_nm, atol=5e-5, rtol=5e-5)

    # Single-sample path, returns (D,).
    out_single = attention_aggregator(x[0], query, wk, bk, wv, bv)
    out_single = jax.block_until_ready(out_single)
    ref_single = _reference(x[:1], query, wk, bk, wv, bv,
                            jnp.ones((1, N), dtype=bool))[0]
    assert out_single.shape == (D,)
    assert jnp.allclose(out_single, ref_single, atol=5e-5, rtol=5e-5)

    print("KERNEL_OK")
</pallas_src>

<mosaic_0001>
module attributes {stable_mosaic.version = 11 : i64} {
  func.func @_attn_agg_kernel_masked(%arg0: i32, %arg1: memref<16x8x32xf32, #tpu.memory_space<vmem>>, %arg2: memref<16x8x1xi32, #tpu.memory_space<vmem>>, %arg3: memref<1x1x32xf32, #tpu.memory_space<vmem>>, %arg4: memref<32x32xf32, #tpu.memory_space<vmem>>, %arg5: memref<1x32xf32, #tpu.memory_space<vmem>>, %arg6: memref<16x32xf32, #tpu.memory_space<vmem>>) attributes {dimension_semantics = [#tpu.dimension_semantics<parallel>], iteration_bounds = array<i64: 1>, scalar_prefetch = 0 : i64, scratch_operands = 0 : i64, tpu.core_type = #tpu.core_type<tc>, window_params = [{transform_indices = @transform_0, window_bounds = array<i64: 16, 8, 32>}, {transform_indices = @transform_1, window_bounds = array<i64: 16, 8, 1>}, {pipeline_mode = #tpu.pipeline_mode<synchronous>, transform_indices = @transform_2, window_bounds = array<i64: 1, 1, 32>}, {pipeline_mode = #tpu.pipeline_mode<synchronous>, transform_indices = @transform_3, window_bounds = array<i64: 32, 32>}, {pipeline_mode = #tpu.pipeline_mode<synchronous>, transform_indices = @transform_4, window_bounds = array<i64: 1, 32>}, {transform_indices = @transform_5, window_bounds = array<i64: 16, 32>}]} {
    %c0 = arith.constant 0 : index
    %c0_0 = arith.constant 0 : index
    %c0_1 = arith.constant 0 : index
    %0 = vector.load %arg1[%c0, %c0_0, %c0_1] : memref<16x8x32xf32, #tpu.memory_space<vmem>>, vector<16x8x32xf32>
    %c0_2 = arith.constant 0 : index
    %c0_3 = arith.constant 0 : index
    %c0_4 = arith.constant 0 : index
    %1 = vector.load %arg3[%c0_2, %c0_3, %c0_4] : memref<1x1x32xf32, #tpu.memory_space<vmem>>, vector<1x1x32xf32>
    %2 = vector.broadcast %1 : vector<1x1x32xf32> to vector<16x8x32xf32>
    %3 = arith.mulf %0, %2 : vector<16x8x32xf32>
    %cst = arith.constant dense<0.000000e+00> : vector<16x8xf32>
    %4 = vector.multi_reduction <add>, %3, %cst [2] : vector<16x8x32xf32> to vector<16x8xf32>
    %5 = vector.shape_cast %4 : vector<16x8xf32> to vector<16x8x1xf32>
    %c0_5 = arith.constant 0 : index
    %c0_6 = arith.constant 0 : index
    %c0_7 = arith.constant 0 : index
    %6 = vector.load %arg2[%c0_5, %c0_6, %c0_7] : memref<16x8x1xi32, #tpu.memory_space<vmem>>, vector<16x8x1xi32>
    %c0_i32 = arith.constant 0 : i32
    %7 = vector.broadcast %c0_i32 : i32 to vector<16x8x1xi32>
    %8 = arith.cmpi ne, %6, %7 : vector<16x8x1xi32>
    %cst_8 = arith.constant 0xFF800000 : f32
    %9 = vector.broadcast %cst_8 : f32 to vector<16x8x1xf32>
    %10 = arith.select %8, %5, %9 : vector<16x8x1xi1>, vector<16x8x1xf32>
    %cst_9 = arith.constant dense<0xFF800000> : vector<16x1xf32>
    %11 = vector.multi_reduction <maximumf>, %10, %cst_9 [1] : vector<16x8x1xf32> to vector<16x1xf32>
    %12 = vector.shape_cast %11 : vector<16x1xf32> to vector<16x1x1xf32>
    %cst_10 = arith.constant 0xFF800000 : f32
    %13 = vector.broadcast %cst_10 : f32 to vector<16x1x1xf32>
    %14 = arith.cmpf oeq, %12, %13 : vector<16x1x1xf32>
    %cst_11 = arith.constant 0.000000e+00 : f32
    %15 = vector.broadcast %cst_11 : f32 to vector<16x1x1xf32>
    %16 = arith.select %14, %15, %12 : vector<16x1x1xi1>, vector<16x1x1xf32>
    %17 = vector.broadcast %16 : vector<16x1x1xf32> to vector<16x8x1xf32>
    %18 = arith.subf %10, %17 : vector<16x8x1xf32>
    %19 = math.exp %18 : vector<16x8x1xf32>
    %cst_12 = arith.constant dense<0.000000e+00> : vector<16x1xf32>
    %20 = vector.multi_reduction <add>, %19, %cst_12 [1] : vector<16x8x1xf32> to vector<16x1xf32>
    %21 = vector.shape_cast %20 : vector<16x1xf32> to vector<16x1x1xf32>
    %cst_13 = arith.constant 0.000000e+00 : f32
    %22 = vector.broadcast %cst_13 : f32 to vector<16x1x1xf32>
    %23 = arith.cmpf ogt, %21, %22 : vector<16x1x1xf32>
    %24 = tpu.reciprocal %21 : vector<16x1x1xf32> -> vector<16x1x1xf32>
    %cst_14 = arith.constant 0.000000e+00 : f32
    %25 = vector.broadcast %cst_14 : f32 to vector<16x1x1xf32>
    %26 = arith.select %23, %24, %25 : vector<16x1x1xi1>, vector<16x1x1xf32>
    %27 = vector.broadcast %26 : vector<16x1x1xf32> to vector<16x8x1xf32>
    %28 = arith.mulf %19, %27 : vector<16x8x1xf32>
    %29 = vector.broadcast %28 : vector<16x8x1xf32> to vector<16x8x32xf32>
    %30 = arith.mulf %29, %0 : vector<16x8x32xf32>
    %cst_15 = arith.constant dense<0.000000e+00> : vector<16x32xf32>
    %31 = vector.multi_reduction <add>, %30, %cst_15 [1] : vector<16x8x32xf32> to vector<16x32xf32>
    %32 = vector.shape_cast %21 : vector<16x1x1xf32> to vector<16x1xf32>
    %cst_16 = arith.constant 0.000000e+00 : f32
    %33 = vector.broadcast %cst_16 : f32 to vector<16x1xf32>
    %34 = arith.cmpf ogt, %32, %33 : vector<16x1xf32>
    %cst_17 = arith.constant 1.000000e+00 : f32
    %cst_18 = arith.constant 0.000000e+00 : f32
    %35 = vector.broadcast %cst_17 : f32 to vector<16x1xf32>
    %36 = vector.broadcast %cst_18 : f32 to vector<16x1xf32>
    %37 = arith.select %34, %35, %36 : vector<16x1xi1>, vector<16x1xf32>
    %c0_19 = arith.constant 0 : index
    %c0_20 = arith.constant 0 : index
    %38 = vector.load %arg4[%c0_19, %c0_20] : memref<32x32xf32, #tpu.memory_space<vmem>>, vector<32x32xf32>
    %cst_21 = arith.constant dense<0.000000e+00> : vector<16x32xf32>
    %39 = tpu.matmul %31, %38, %cst_21 {dimension_numbers = #tpu.dot_dimension_numbers<[1], [0], [0], [1], [0, 0, 1, 1], [], []>} : vector<16x32xf32>, vector<32x32xf32>, vector<16x32xf32> -> vector<16x32xf32>
    %c0_22 = arith.constant 0 : index
    %c0_23 = arith.constant 0 : index
    %40 = vector.load %arg5[%c0_22, %c0_23] : memref<1x32xf32, #tpu.memory_space<vmem>>, vector<1x32xf32>
    %41 = vector.broadcast %40 : vector<1x32xf32> to vector<16x32xf32>
    %42 = vector.broadcast %37 : vector<16x1xf32> to vector<16x32xf32>
    %43 = arith.mulf %41, %42 : vector<16x32xf32>
    %44 = arith.addf %39, %43 : vector<16x32xf32>
    %c0_24 = arith.constant 0 : index
    %c0_25 = arith.constant 0 : index
    %45 = vector.load %arg6[%c0_24, %c0_25] : memref<16x32xf32, #tpu.memory_space<vmem>>, vector<16x32xf32>
    tpu.vector_store %arg6[%c0_24, %c0_25], %44 {strides = array<i32>} : memref<16x32xf32, #tpu.memory_space<vmem>>, vector<16x32xf32>,
    return
  }
  func.func @transform_0(%arg0: i32) -> (i32, i32, i32) {
    %c0_i32 = arith.constant 0 : i32
    %c0_i32_0 = arith.constant 0 : i32
    %c0_i32_1 = arith.constant 0 : i32
    return %arg0, %c0_i32, %c0_i32_0 : i32, i32, i32
  }
  func.func @transform_1(%arg0: i32) -> (i32, i32, i32) {
    %c0_i32 = arith.constant 0 : i32
    %c0_i32_0 = arith.constant 0 : i32
    %c0_i32_1 = arith.constant 0 : i32
    return %arg0, %c0_i32, %c0_i32_0 : i32, i32, i32
  }
  func.func @transform_2(%arg0: i32) -> (i32, i32, i32) {
    %c0_i32 = arith.constant 0 : i32
    %c0_i32_0 = arith.constant 0 : i32
    %c0_i32_1 = arith.constant 0 : i32
    %c0_i32_2 = arith.constant 0 : i32
    return %c0_i32, %c0_i32_0, %c0_i32_1 : i32, i32, i32
  }
  func.func @transform_3(%arg0: i32) -> (i32, i32) {
    %c0_i32 = arith.constant 0 : i32
    %c0_i32_0 = arith.constant 0 : i32
    %c0_i32_1 = arith.constant 0 : i32
    return %c0_i32, %c0_i32_0 : i32, i32
  }
  func.func @transform_4(%arg0: i32) -> (i32, i32) {
    %c0_i32 = arith.constant 0 : i32
    %c0_i32_0 = arith.constant 0 : i32
    %c0_i32_1 = arith.constant 0 : i32
    return %c0_i32, %c0_i32_0 : i32, i32
  }
  func.func @transform_5(%arg0: i32) -> (i32, i32) {
    %c0_i32 = arith.constant 0 : i32
    %c0_i32_0 = arith.constant 0 : i32
    return %arg0, %c0_i32 : i32, i32
  }
}

</mosaic_0001>

<llo_original>
// kernel: tpu_custom_call.1
$region0: #{tpu_custom_call.1}
  #allocation0 [shape = 'u32[]', space=smem, size = 0x4, offset = 0x4, fixed_abs, tag = 'smem constant byte address 0x4 - core index']
  #allocation1 [shape = 'u32[72,128]{1,0:T(1,128)}', space=vmem, size = 0x9000, scoped, tag = 'internal scratch']
  %s0 = inlined_call_operand.vmem [shape: f32[16,8,32], index: 0, kind: input, shape index: {}]
  %s1 = inlined_call_operand.vmem [shape: s32[16,8,1], index: 1, kind: input, shape index: {}]
  %s2 = inlined_call_operand.vmem [shape: f32[1,1,32], index: 2, kind: input, shape index: {}]
  %s3 = inlined_call_operand.hbm [shape: f32[32,32], index: 3, kind: input, shape index: {}]
  %s4 = inlined_call_operand.vmem [shape: f32[1,32], index: 4, kind: input, shape index: {}]
  %s5 = inlined_call_operand.hbm [shape: f32[16,32], index: 5, kind: output, shape index: {}]
  %s6 = sld [smem:[#allocation0]]
  $region34: #{tpu_custom_call.1} parent=0
    _
  %s8 = ssub.s32 1, %s6
  %s9 = scalar_select 0, %s8, %s6
  $region1: #{tpu_custom_call.1} parent=0
    #allocation2 [shape = 'u8[16384]{0}', space=vmem, size = 0x4000, scoped, tag = 'input window, operand 3, single buffered']
    #allocation3 [shape = 's32[1]{0}', space=sflag, size = 0x4, scoped, tag = 'scoped memory for tpu_custom_call.1']
    #allocation4 [shape = 's32[1]{0}', space=sflag, size = 0x4, scoped, tag = 'scoped memory for tpu_custom_call.1']
    #allocation5 [shape = 'u8[8192]{0}', space=vmem, size = 0x2000, scoped, tag = 'output window, operand 0, single buffered']
    %10 = vsyncpa [#allocation3], 0
    %11 = vsyncpa [#allocation4], 0
    // Predicated region
    $region2: #{tpu_custom_call.1} parent=1 // pred_check
      _
    $region3: #{tpu_custom_call.1} parent=1 // pred_check_branch
      %13 = sbr.rel (0) target = $region5
    $region4: #{tpu_custom_call.1} parent=1 // pred_region
      _
    $region5: #{tpu_custom_call.1} parent=1 // pred_fallthru
      _
    // Predicated region
    $region6: #{tpu_custom_call.1} parent=1 // pred_check
      _
    $region7: #{tpu_custom_call.1} parent=1 // pred_check_branch
      %15 = sbr.rel (0) target = $region9
    $region8: #{tpu_custom_call.1} parent=1 // pred_region
      _
    $region9: #{tpu_custom_call.1} parent=1 // pred_fallthru
      _
    // Predicated region
    $region10: #{tpu_custom_call.1} parent=1 // pred_check
      _
    $region11: #{tpu_custom_call.1} parent=1 // pred_check_branch
      %17 = sbr.rel (0) target = $region13
    $region12: #{tpu_custom_call.1} parent=1 // pred_region
      _
    $region13: #{tpu_custom_call.1} parent=1 // pred_fallthru
      _
    // Predicated region
    $region14: #{tpu_custom_call.1} parent=1 // pred_check
      _
    $region15: #{tpu_custom_call.1} parent=1 // pred_check_branch
      %19 = sbr.rel (0) target = $region17
    $region16: #{tpu_custom_call.1} parent=1 // pred_region
      %21 = vsyncadd [#allocation3], 0
      %s22 = sshll.u32 %s3, 4
      %s23 = int_to_ptr.hbm [resolvable:$true] %s22
      %s24 = sshll.u32 [#allocation2], 4
      %s25 = int_to_ptr.vmem [resolvable:$true] %s24
      %30 = dma.hbm_to_vmem [thread:$0]  %s23, 512, %s25, [#allocation3], 128, 128, 8
    $region17: #{tpu_custom_call.1} parent=1 // pred_fallthru
      _
    // Predicated region
    $region18: #{tpu_custom_call.1} parent=1 // pred_check
      _
    $region19: #{tpu_custom_call.1} parent=1 // pred_check_branch
      %32 = sbr.rel (0) target = $region21
    $region20: #{tpu_custom_call.1} parent=1 // pred_region
      _
    $region21: #{tpu_custom_call.1} parent=1 // pred_fallthru
      _
    // Predicated region
    $region22: #{tpu_custom_call.1} parent=1 // pred_check
      _
    $region23: #{tpu_custom_call.1} parent=1 // pred_check_branch
      %34 = sbr.rel (0) target = $region25
    $region24: #{tpu_custom_call.1} parent=1 // pred_region
      %36 = dma.done [#allocation3], 512
    $region25: #{tpu_custom_call.1} parent=1 // pred_fallthru
      _
    %v37 = vld [vmem:[%s0] sm:$0xff]
    %v38 = vld [vmem:[%s0 + $0x8] sm:$0xff]
    %v39 = vld [vmem:[%s0 + $0x10] sm:$0xff]
    %v40 = vld [vmem:[%s0 + $0x18] sm:$0xff]
    %v41 = vld [vmem:[%s0 + $0x20] sm:$0xff]
    %v42 = vld [vmem:[%s0 + $0x28] sm:$0xff]
    %v43 = vld [vmem:[%s0 + $0x30] sm:$0xff]
    %v44 = vld [vmem:[%s0 + $0x38] sm:$0xff]
    %v45 = vld [vmem:[%s0 + $0x40] sm:$0xff]
    %v46 = vld [vmem:[%s0 + $0x48] sm:$0xff]
    %v47 = vld [vmem:[%s0 + $0x50] sm:$0xff]
    %v48 = vld [vmem:[%s0 + $0x58] sm:$0xff]
    %v49 = vld [vmem:[%s0 + $0x60] sm:$0xff]
    %v50 = vld [vmem:[%s0 + $0x68] sm:$0xff]
    %v51 = vld [vmem:[%s0 + $0x70] sm:$0xff]
    %v52 = vld [vmem:[%s0 + $0x78] sm:$0xff]
    %v53 = vld [vmem:[%s2] sm:$0x1]
    %v55 = vperm.slane %v53, 0
    %v57 = vmul.f32 %v37, %v55
    %v58 = vmul.f32 %v38, %v55
    %v59 = vmul.f32 %v39, %v55
    %v60 = vmul.f32 %v40, %v55
    %v61 = vmul.f32 %v41, %v55
    %v62 = vmul.f32 %v42, %v55
    %v63 = vmul.f32 %v43, %v55
    %v64 = vmul.f32 %v44, %v55
    %v65 = vmul.f32 %v45, %v55
    %v66 = vmul.f32 %v46, %v55
    %v67 = vmul.f32 %v47, %v55
    %v68 = vmul.f32 %v48, %v55
    %v69 = vmul.f32 %v49, %v55
    %v70 = vmul.f32 %v50, %v55
    %v71 = vmul.f32 %v51, %v55
    %v72 = vmul.f32 %v52, %v55
    %vm73 = vcmask 261120
    %v74 = vsel %vm73, %v57, 0.0
    %75 = vadd.xlane.f32.xlu0 %v74
    %v76 = vpop.xlane.xlu0 %75
    %v77 = vsel %vm73, %v58, 0.0
    %78 = vadd.xlane.f32.xlu0 %v77
    %v79 = vpop.xlane.xlu0 %78
    %v80 = vsel %vm73, %v59, 0.0
    %81 = vadd.xlane.f32.xlu0 %v80
    %v82 = vpop.xlane.xlu0 %81
    %v83 = vsel %vm73, %v60, 0.0
    %84 = vadd.xlane.f32.xlu0 %v83
    %v85 = vpop.xlane.xlu0 %84
    %v86 = vsel %vm73, %v61, 0.0
    %87 = vadd.xlane.f32.xlu0 %v86
    %v88 = vpop.xlane.xlu0 %87
    %v89 = vsel %vm73, %v62, 0.0
    %90 = vadd.xlane.f32.xlu0 %v89
    %v91 = vpop.xlane.xlu0 %90
    %v92 = vsel %vm73, %v63, 0.0
    %93 = vadd.xlane.f32.xlu0 %v92
    %v94 = vpop.xlane.xlu0 %93
    %v95 = vsel %vm73, %v64, 0.0
    %96 = vadd.xlane.f32.xlu0 %v95
    %v97 = vpop.xlane.xlu0 %96
    %v98 = vsel %vm73, %v65, 0.0
    %99 = vadd.xlane.f32.xlu0 %v98
    %v100 = vpop.xlane.xlu0 %99
    %v101 = vsel %vm73, %v66, 0.0
    %102 = vadd.xlane.f32.xlu0 %v101
    %v103 = vpop.xlane.xlu0 %102
    %v104 = vsel %vm73, %v67, 0.0
    %105 = vadd.xlane.f32.xlu0 %v104
    %v106 = vpop.xlane.xlu0 %105
    %v107 = vsel %vm73, %v68, 0.0
    %108 = vadd.xlane.f32.xlu0 %v107
    %v109 = vpop.xlane.xlu0 %108
    %v110 = vsel %vm73, %v69, 0.0
    %111 = vadd.xlane.f32.xlu0 %v110
    %v112 = vpop.xlane.xlu0 %111
    %v113 = vsel %vm73, %v70, 0.0
    %114 = vadd.xlane.f32.xlu0 %v113
    %v115 = vpop.xlane.xlu0 %114
    %v116 = vsel %vm73, %v71, 0.0
    %117 = vadd.xlane.f32.xlu0 %v116
    %v118 = vpop.xlane.xlu0 %117
    %v119 = vsel %vm73, %v72, 0.0
    %120 = vadd.xlane.f32.xlu0 %v119
    %v121 = vpop.xlane.xlu0 %120
    %v122 = vld [vmem:[%s1] sm:$0xff]
    %v123 = vld [vmem:[%s1 + $0x8] sm:$0xff]
    %v124 = vld [vmem:[%s1 + $0x10] sm:$0xff]
    %v125 = vld [vmem:[%s1 + $0x18] sm:$0xff]
    %v126 = vld [vmem:[%s1 + $0x20] sm:$0xff]
    %v127 = vld [vmem:[%s1 + $0x28] sm:$0xff]
    %v128 = vld [vmem:[%s1 + $0x30] sm:$0xff]
    %v129 = vld [vmem:[%s1 + $0x38] sm:$0xff]
    %v130 = vld [vmem:[%s1 + $0x40] sm:$0xff]
    %v131 = vld [vmem:[%s1 + $0x48] sm:$0xff]
    %v132 = vld [vmem:[%s1 + $0x50] sm:$0xff]
    %v133 = vld [vmem:[%s1 + $0x58] sm:$0xff]
    %v134 = vld [vmem:[%s1 + $0x60] sm:$0xff]
    %v135 = vld [vmem:[%s1 + $0x68] sm:$0xff]
    %v136 = vld [vmem:[%s1 + $0x70] sm:$0xff]
    %v137 = vld [vmem:[%s1 + $0x78] sm:$0xff]
    %vm138 = vcmp.ne.s32.totalorder %v122, 0
    %vm139 = vcmp.ne.s32.totalorder %v123, 0
    %vm140 = vcmp.ne.s32.totalorder %v124, 0
    %vm141 = vcmp.ne.s32.totalorder %v125, 0
    %vm142 = vcmp.ne.s32.totalorder %v126, 0
    %vm143 = vcmp.ne.s32.totalorder %v127, 0
    %vm144 = vcmp.ne.s32.totalorder %v128, 0
    %vm145 = vcmp.ne.s32.totalorder %v129, 0
    %vm146 = vcmp.ne.s32.totalorder %v130, 0
    %vm147 = vcmp.ne.s32.totalorder %v131, 0
    %vm148 = vcmp.ne.s32.totalorder %v132, 0
    %vm149 = vcmp.ne.s32.totalorder %v133, 0
    %vm150 = vcmp.ne.s32.totalorder %v134, 0
    %vm151 = vcmp.ne.s32.totalorder %v135, 0
    %vm152 = vcmp.ne.s32.totalorder %v136, 0
    %vm153 = vcmp.ne.s32.totalorder %v137, 0
    %v154 = vsel %vm138, %v76, -inf
    %v155 = vsel %vm139, %v79, -inf
    %v156 = vsel %vm140, %v82, -inf
    %v157 = vsel %vm141, %v85, -inf
    %v158 = vsel %vm142, %v88, -inf
    %v159 = vsel %vm143, %v91, -inf
    %v160 = vsel %vm144, %v94, -inf
    %v161 = vsel %vm145, %v97, -inf
    %v162 = vsel %vm146, %v100, -inf
    %v163 = vsel %vm147, %v103, -inf
    %v164 = vsel %vm148, %v106, -inf
    %v165 = vsel %vm149, %v109, -inf
    %v166 = vsel %vm150, %v112, -inf
    %v167 = vsel %vm151, %v115, -inf
    %v168 = vsel %vm152, %v118, -inf
    %v169 = vsel %vm153, %v121, -inf
    %vm170 = vcmask 7168
    %v171 = vsel %vm170, %v154, -inf
    %v172 = vrot.slane %v171, 4
    %v173 = vmax.f32 %v171, %v172
    %v174 = vrot.slane %v173, 2
    %v175 = vmax.f32 %v173, %v174
    %v176 = vrot.slane %v175, 1
    %v177 = vmax.f32 %v175, %v176
    %v178 = vsel %vm170, %v155, -inf
    %v179 = vrot.slane %v178, 4
    %v180 = vmax.f32 %v178, %v179
    %v181 = vrot.slane %v180, 2
    %v182 = vmax.f32 %v180, %v181
    %v183 = vrot.slane %v182, 1
    %v184 = vmax.f32 %v182, %v183
    %v185 = vsel %vm170, %v156, -inf
    %v186 = vrot.slane %v185, 4
    %v187 = vmax.f32 %v185, %v186
    %v188 = vrot.slane %v187, 2
    %v189 = vmax.f32 %v187, %v188
    %v190 = vrot.slane %v189, 1
    %v191 = vmax.f32 %v189, %v190
    %v192 = vsel %vm170, %v157, -inf
    %v193 = vrot.slane %v192, 4
    %v194 = vmax.f32 %v192, %v193
    %v195 = vrot.slane %v194, 2
    %v196 = vmax.f32 %v194, %v195
    %v197 = vrot.slane %v196, 1
    %v198 = vmax.f32 %v196, %v197
    %v199 = vsel %vm170, %v158, -inf
    %v200 = vrot.slane %v199, 4
    %v201 = vmax.f32 %v199, %v200
    %v202 = vrot.slane %v201, 2
    %v203 = vmax.f32 %v201, %v202
    %v204 = vrot.slane %v203, 1
    %v205 = vmax.f32 %v203, %v204
    %v206 = vsel %vm170, %v159, -inf
    %v207 = vrot.slane %v206, 4
    %v208 = vmax.f32 %v206, %v207
    %v209 = vrot.slane %v208, 2
    %v210 = vmax.f32 %v208, %v209
    %v211 = vrot.slane %v210, 1
    %v212 = vmax.f32 %v210, %v211
    %v213 = vsel %vm170, %v160, -inf
    %v214 = vrot.slane %v213, 4
    %v215 = vmax.f32 %v213, %v214
    %v216 = vrot.slane %v215, 2
    %v217 = vmax.f32 %v215, %v216
    %v218 = vrot.slane %v217, 1
    %v219 = vmax.f32 %v217, %v218
    %v220 = vsel %vm170, %v161, -inf
    %v221 = vrot.slane %v220, 4
    %v222 = vmax.f32 %v220, %v221
    %v223 = vrot.slane %v222, 2
    %v224 = vmax.f32 %v222, %v223
    %v225 = vrot.slane %v224, 1
    %v226 = vmax.f32 %v224, %v225
    %v227 = vsel %vm170, %v162, -inf
    %v228 = vrot.slane %v227, 4
    %v229 = vmax.f32 %v227, %v228
    %v230 = vrot.slane %v229, 2
    %v231 = vmax.f32 %v229, %v230
    %v232 = vrot.slane %v231, 1
    %v233 = vmax.f32 %v231, %v232
    %v234 = vsel %vm170, %v163, -inf
    %v235 = vrot.slane %v234, 4
    %v236 = vmax.f32 %v234, %v235
    %v237 = vrot.slane %v236, 2
    %v238 = vmax.f32 %v236, %v237
    %v239 = vrot.slane %v238, 1
    %v240 = vmax.f32 %v238, %v239
    %v241 = vsel %vm170, %v164, -inf
    %v242 = vrot.slane %v241, 4
    %v243 = vmax.f32 %v241, %v242
    %v244 = vrot.slane %v243, 2
    %v245 = vmax.f32 %v243, %v244
    %v246 = vrot.slane %v245, 1
    %v247 = vmax.f32 %v245, %v246
    %v248 = vsel %vm170, %v165, -inf
    %v249 = vrot.slane %v248, 4
    %v250 = vmax.f32 %v248, %v249
    %v251 = vrot.slane %v250, 2
    %v252 = vmax.f32 %v250, %v251
    %v253 = vrot.slane %v252, 1
    %v254 = vmax.f32 %v252, %v253
    %v255 = vsel %vm170, %v166, -inf
    %v256 = vrot.slane %v255, 4
    %v257 = vmax.f32 %v255, %v256
    %v258 = vrot.slane %v257, 2
    %v259 = vmax.f32 %v257, %v258
    %v260 = vrot.slane %v259, 1
    %v261 = vmax.f32 %v259, %v260
    %v262 = vsel %vm170, %v167, -inf
    %v263 = vrot.slane %v262, 4
    %v264 = vmax.f32 %v262, %v263
    %v265 = vrot.slane %v264, 2
    %v266 = vmax.f32 %v264, %v265
    %v267 = vrot.slane %v266, 1
    %v268 = vmax.f32 %v266, %v267
    %v269 = vsel %vm170, %v168, -inf
    %v270 = vrot.slane %v269, 4
    %v271 = vmax.f32 %v269, %v270
    %v272 = vrot.slane %v271, 2
    %v273 = vmax.f32 %v271, %v272
    %v274 = vrot.slane %v273, 1
    %v275 = vmax.f32 %v273, %v274
    %v276 = vsel %vm170, %v169, -inf
    %v277 = vrot.slane %v276, 4
    %v278 = vmax.f32 %v276, %v277
    %v279 = vrot.slane %v278, 2
    %v280 = vmax.f32 %v278, %v279
    %v281 = vrot.slane %v280, 1
    %v282 = vmax.f32 %v280, %v281
    %vm283 = vcmp.eq.f32.partialorder %v177, -inf
    %vm284 = vcmp.eq.f32.partialorder %v184, -inf
    %vm285 = vcmp.eq.f32.partialorder %v191, -inf
    %vm286 = vcmp.eq.f32.partialorder %v198, -inf
    %vm287 = vcmp.eq.f32.partialorder %v205, -inf
    %vm288 = vcmp.eq.f32.partialorder %v212, -inf
    %vm289 = vcmp.eq.f32.partialorder %v219, -inf
    %vm290 = vcmp.eq.f32.partialorder %v226, -inf
    %vm291 = vcmp.eq.f32.partialorder %v233, -inf
    %vm292 = vcmp.eq.f32.partialorder %v240, -inf
    %vm293 = vcmp.eq.f32.partialorder %v247, -inf
    %vm294 = vcmp.eq.f32.partialorder %v254, -inf
    %vm295 = vcmp.eq.f32.partialorder %v261, -inf
    %vm296 = vcmp.eq.f32.partialorder %v268, -inf
    %vm297 = vcmp.eq.f32.partialorder %v275, -inf
    %vm298 = vcmp.eq.f32.partialorder %v282, -inf
    %v299 = vsel %vm283, 0.0, %v177
    %v300 = vsel %vm284, 0.0, %v184
    %v301 = vsel %vm285, 0.0, %v191
    %v302 = vsel %vm286, 0.0, %v198
    %v303 = vsel %vm287, 0.0, %v205
    %v304 = vsel %vm288, 0.0, %v212
    %v305 = vsel %vm289, 0.0, %v219
    %v306 = vsel %vm290, 0.0, %v226
    %v307 = vsel %vm291, 0.0, %v233
    %v308 = vsel %vm292, 0.0, %v240
    %v309 = vsel %vm293, 0.0, %v247
    %v310 = vsel %vm294, 0.0, %v254
    %v311 = vsel %vm295, 0.0, %v261
    %v312 = vsel %vm296, 0.0, %v268
    %v313 = vsel %vm297, 0.0, %v275
    %v314 = vsel %vm298, 0.0, %v282
    %v315 = vsub.f32 %v154, %v299
    %v316 = vsub.f32 %v155, %v300
    %v317 = vsub.f32 %v156, %v301
    %v318 = vsub.f32 %v157, %v302
    %v319 = vsub.f32 %v158, %v303
    %v320 = vsub.f32 %v159, %v304
    %v321 = vsub.f32 %v160, %v305
    %v322 = vsub.f32 %v161, %v306
    %v323 = vsub.f32 %v162, %v307
    %v324 = vsub.f32 %v163, %v308
    %v325 = vsub.f32 %v164, %v309
    %v326 = vsub.f32 %v165, %v310
    %v327 = vsub.f32 %v166, %v311
    %v328 = vsub.f32 %v167, %v312
    %v329 = vsub.f32 %v168, %v313
    %v330 = vsub.f32 %v169, %v314
    %v331 = vmul.f32 %v315, 1.442695
    %v332 = vpow.pop %v331
    %v333 = vmul.f32 %v316, 1.442695
    %v334 = vpow.pop %v333
    %v335 = vmul.f32 %v317, 1.442695
    %v336 = vpow.pop %v335
    %v337 = vmul.f32 %v318, 1.442695
    %v338 = vpow.pop %v337
    %v339 = vmul.f32 %v319, 1.442695
    %v340 = vpow.pop %v339
    %v341 = vmul.f32 %v320, 1.442695
    %v342 = vpow.pop %v341
    %v343 = vmul.f32 %v321, 1.442695
    %v344 = vpow.pop %v343
    %v345 = vmul.f32 %v322, 1.442695
    %v346 = vpow.pop %v345
    %v347 = vmul.f32 %v323, 1.442695
    %v348 = vpow.pop %v347
    %v349 = vmul.f32 %v324, 1.442695
    %v350 = vpow.pop %v349
    %v351 = vmul.f32 %v325, 1.442695
    %v352 = vpow.pop %v351
    %v353 = vmul.f32 %v326, 1.442695
    %v354 = vpow.pop %v353
    %v355 = vmul.f32 %v327, 1.442695
    %v356 = vpow.pop %v355
    %v357 = vmul.f32 %v328, 1.442695
    %v358 = vpow.pop %v357
    %v359 = vmul.f32 %v329, 1.442695
    %v360 = vpow.pop %v359
    %v361 = vmul.f32 %v330, 1.442695
    %v362 = vpow.pop %v361
    %v363 = vsel %vm170, %v332, 0.0
    %v364 = vrot.slane %v363, 4
    %v365 = vadd.f32 %v363, %v364
    %v366 = vrot.slane %v365, 2
    %v367 = vadd.f32 %v365, %v366
    %v368 = vrot.slane %v367, 1
    %v369 = vadd.f32 %v367, %v368
    %v370 = vsel %vm170, %v334, 0.0
    %v371 = vrot.slane %v370, 4
    %v372 = vadd.f32 %v370, %v371
    %v373 = vrot.slane %v372, 2
    %v374 = vadd.f32 %v372, %v373
    %v375 = vrot.slane %v374, 1
    %v376 = vadd.f32 %v374, %v375
    %v377 = vsel %vm170, %v336, 0.0
    %v378 = vrot.slane %v377, 4
    %v379 = vadd.f32 %v377, %v378
    %v380 = vrot.slane %v379, 2
    %v381 = vadd.f32 %v379, %v380
    %v382 = vrot.slane %v381, 1
    %v383 = vadd.f32 %v381, %v382
    %v384 = vsel %vm170, %v338, 0.0
    %v385 = vrot.slane %v384, 4
    %v386 = vadd.f32 %v384, %v385
    %v387 = vrot.slane %v386, 2
    %v388 = vadd.f32 %v386, %v387
    %v389 = vrot.slane %v388, 1
    %v390 = vadd.f32 %v388, %v389
    %v391 = vsel %vm170, %v340, 0.0
    %v392 = vrot.slane %v391, 4
    %v393 = vadd.f32 %v391, %v392
    %v394 = vrot.slane %v393, 2
    %v395 = vadd.f32 %v393, %v394
    %v396 = vrot.slane %v395, 1
    %v397 = vadd.f32 %v395, %v396
    %v398 = vsel %vm170, %v342, 0.0
    %v399 = vrot.slane %v398, 4
    %v400 = vadd.f32 %v398, %v399
    %v401 = vrot.slane %v400, 2
    %v402 = vadd.f32 %v400, %v401
    %v403 = vrot.slane %v402, 1
    %v404 = vadd.f32 %v402, %v403
    %v405 = vsel %vm170, %v344, 0.0
    %v406 = vrot.slane %v405, 4
    %v407 = vadd.f32 %v405, %v406
    %v408 = vrot.slane %v407, 2
    %v409 = vadd.f32 %v407, %v408
    %v410 = vrot.slane %v409, 1
    %v411 = vadd.f32 %v409, %v410
    %v412 = vsel %vm170, %v346, 0.0
    %v413 = vrot.slane %v412, 4
    %v414 = vadd.f32 %v412, %v413
    %v415 = vrot.slane %v414, 2
    %v416 = vadd.f32 %v414, %v415
    %v417 = vrot.slane %v416, 1
    %v418 = vadd.f32 %v416, %v417
    %v419 = vsel %vm170, %v348, 0.0
    %v420 = vrot.slane %v419, 4
    %v421 = vadd.f32 %v419, %v420
    %v422 = vrot.slane %v421, 2
    %v423 = vadd.f32 %v421, %v422
    %v424 = vrot.slane %v423, 1
    %v425 = vadd.f32 %v423, %v424
    %v426 = vsel %vm170, %v350, 0.0
    %v427 = vrot.slane %v426, 4
    %v428 = vadd.f32 %v426, %v427
    %v429 = vrot.slane %v428, 2
    %v430 = vadd.f32 %v428, %v429
    %v431 = vrot.slane %v430, 1
    %v432 = vadd.f32 %v430, %v431
    %v433 = vsel %vm170, %v352, 0.0
    %v434 = vrot.slane %v433, 4
    %v435 = vadd.f32 %v433, %v434
    %v436 = vrot.slane %v435, 2
    %v437 = vadd.f32 %v435, %v436
    %v438 = vrot.slane %v437, 1
    %v439 = vadd.f32 %v437, %v438
    %v440 = vsel %vm170, %v354, 0.0
    %v441 = vrot.slane %v440, 4
    %v442 = vadd.f32 %v440, %v441
    %v443 = vrot.slane %v442, 2
    %v444 = vadd.f32 %v442, %v443
    %v445 = vrot.slane %v444, 1
    %v446 = vadd.f32 %v444, %v445
    %v447 = vsel %vm170, %v356, 0.0
    %v448 = vrot.slane %v447, 4
    %v449 = vadd.f32 %v447, %v448
    %v450 = vrot.slane %v449, 2
    %v451 = vadd.f32 %v449, %v450
    %v452 = vrot.slane %v451, 1
    %v453 = vadd.f32 %v451, %v452
    %v454 = vsel %vm170, %v358, 0.0
    %v455 = vrot.slane %v454, 4
    %v456 = vadd.f32 %v454, %v455
    %v457 = vrot.slane %v456, 2
    %v458 = vadd.f32 %v456, %v457
    %v459 = vrot.slane %v458, 1
    %v460 = vadd.f32 %v458, %v459
    %v461 = vsel %vm170, %v360, 0.0
    %v462 = vrot.slane %v461, 4
    %v463 = vadd.f32 %v461, %v462
    %v464 = vrot.slane %v463, 2
    %v465 = vadd.f32 %v463, %v464
    %v466 = vrot.slane %v465, 1
    %v467 = vadd.f32 %v465, %v466
    %v468 = vsel %vm170, %v362, 0.0
    %v469 = vrot.slane %v468, 4
    %v470 = vadd.f32 %v468, %v469
    %v471 = vrot.slane %v470, 2
    %v472 = vadd.f32 %v470, %v471
    %v473 = vrot.slane %v472, 1
    %v474 = vadd.f32 %v472, %v473
    %vm475 = vcmp.gt.f32.partialorder %v369, 0.0
    %vm476 = vcmp.gt.f32.partialorder %v376, 0.0
    %vm477 = vcmp.gt.f32.partialorder %v383, 0.0
    %vm478 = vcmp.gt.f32.partialorder %v390, 0.0
    %vm479 = vcmp.gt.f32.partialorder %v397, 0.0
    %vm480 = vcmp.gt.f32.partialorder %v404, 0.0
    %vm481 = vcmp.gt.f32.partialorder %v411, 0.0
    %vm482 = vcmp.gt.f32.partialorder %v418, 0.0
    %vm483 = vcmp.gt.f32.partialorder %v425, 0.0
    %vm484 = vcmp.gt.f32.partialorder %v432, 0.0
    %vm485 = vcmp.gt.f32.partialorder %v439, 0.0
    %vm486 = vcmp.gt.f32.partialorder %v446, 0.0
    %vm487 = vcmp.gt.f32.partialorder %v453, 0.0
    %vm488 = vcmp.gt.f32.partialorder %v460, 0.0
    %vm489 = vcmp.gt.f32.partialorder %v467, 0.0
    %vm490 = vcmp.gt.f32.partialorder %v474, 0.0
    %v491 = vrcp.pop %v369
    %v492 = vmul.f32 %v369, %v491
    %v493 = vsub.f32 1.0, %v492
    %v494 = vmul.f32 %v491, %v493
    %v495 = vadd.f32 %v491, %v494
    %vm496 = vweird.f32 %v369
    %vm497 = vweird.f32 %v491
    %vm498 = vmor %vm496, %vm497
    %v499 = vsel %vm498, %v491, %v495
    %v500 = vand.u32 2147483647, %v369
    %vm501 = vcmp.eq.f32.partialorder %v500, 8.507059e+37
    %v502 = vand.u32 %v369, 2147483648
    %v503 = vor.u32 1.1754944e-38, %v502
    %v504 = vsel %vm501, %v503, %v499
    %v505 = vrcp.pop %v376
    %v506 = vmul.f32 %v376, %v505
    %v507 = vsub.f32 1.0, %v506
    %v508 = vmul.f32 %v505, %v507
    %v509 = vadd.f32 %v505, %v508
    %vm510 = vweird.f32 %v376
    %vm511 = vweird.f32 %v505
    %vm512 = vmor %vm510, %vm511
    %v513 = vsel %vm512, %v505, %v509
    %v514 = vand.u32 2147483647, %v376
    %vm515 = vcmp.eq.f32.partialorder %v514, 8.507059e+37
    %v516 = vand.u32 %v376, 2147483648
    %v517 = vor.u32 1.1754944e-38, %v516
    %v518 = vsel %vm515, %v517, %v513
    %v519 = vrcp.pop %v383
    %v520 = vmul.f32 %v383, %v519
    %v521 = vsub.f32 1.0, %v520
    %v522 = vmul.f32 %v519, %v521
    %v523 = vadd.f32 %v519, %v522
    %vm524 = vweird.f32 %v383
    %vm525 = vweird.f32 %v519
    %vm526 = vmor %vm524, %vm525
    %v527 = vsel %vm526, %v519, %v523
    %v528 = vand.u32 2147483647, %v383
    %vm529 = vcmp.eq.f32.partialorder %v528, 8.507059e+37
    %v530 = vand.u32 %v383, 2147483648
    %v531 = vor.u32 1.1754944e-38, %v530
    %v532 = vsel %vm529, %v531, %v527
    %v533 = vrcp.pop %v390
    %v534 = vmul.f32 %v390, %v533
    %v535 = vsub.f32 1.0, %v534
    %v536 = vmul.f32 %v533, %v535
    %v537 = vadd.f32 %v533, %v536
    %vm538 = vweird.f32 %v390
    %vm539 = vweird.f32 %v533
    %vm540 = vmor %vm538, %vm539
    %v541 = vsel %vm540, %v533, %v537
    %v542 = vand.u32 2147483647, %v390
    %vm543 = vcmp.eq.f32.partialorder %v542, 8.507059e+37
    %v544 = vand.u32 %v390, 2147483648
    %v545 = vor.u32 1.1754944e-38, %v544
    %v546 = vsel %vm543, %v545, %v541
    %v547 = vrcp.pop %v397
    %v548 = vmul.f32 %v397, %v547
    %v549 = vsub.f32 1.0, %v548
    %v550 = vmul.f32 %v547, %v549
    %v551 = vadd.f32 %v547, %v550
    %vm552 = vweird.f32 %v397
    %vm553 = vweird.f32 %v547
    %vm554 = vmor %vm552, %vm553
    %v555 = vsel %vm554, %v547, %v551
    %v556 = vand.u32 2147483647, %v397
    %vm557 = vcmp.eq.f32.partialorder %v556, 8.507059e+37
    %v558 = vand.u32 %v397, 2147483648
    %v559 = vor.u32 1.1754944e-38, %v558
    %v560 = vsel %vm557, %v559, %v555
    %v561 = vrcp.pop %v404
    %v562 = vmul.f32 %v404, %v561
    %v563 = vsub.f32 1.0, %v562
    %v564 = vmul.f32 %v561, %v563
    %v565 = vadd.f32 %v561, %v564
    %vm566 = vweird.f32 %v404
    %vm567 = vweird.f32 %v561
    %vm568 = vmor %vm566, %vm567
    %v569 = vsel %vm568, %v561, %v565
    %v570 = vand.u32 2147483647, %v404
    %vm571 = vcmp.eq.f32.partialorder %v570, 8.507059e+37
    %v572 = vand.u32 %v404, 2147483648
    %v573 = vor.u32 1.1754944e-38, %v572
    %v574 = vsel %vm571, %v573, %v569
    %v575 = vrcp.pop %v411
    %v576 = vmul.f32 %v411, %v575
    %v577 = vsub.f32 1.0, %v576
    %v578 = vmul.f32 %v575, %v577
    %v579 = vadd.f32 %v575, %v578
    %vm580 = vweird.f32 %v411
    %vm581 = vweird.f32 %v575
    %vm582 = vmor %vm580, %vm581
    %v583 = vsel %vm582, %v575, %v579
    %v584 = vand.u32 2147483647, %v411
    %vm585 = vcmp.eq.f32.partialorder %v584, 8.507059e+37
    %v586 = vand.u32 %v411, 2147483648
    %v587 = vor.u32 1.1754944e-38, %v586
    %v588 = vsel %vm585, %v587, %v583
    %v589 = vrcp.pop %v418
    %v590 = vmul.f32 %v418, %v589
    %v591 = vsub.f32 1.0, %v590
    %v592 = vmul.f32 %v589, %v591
    %v593 = vadd.f32 %v589, %v592
    %vm594 = vweird.f32 %v418
    %vm595 = vweird.f32 %v589
    %vm596 = vmor %vm594, %vm595
    %v597 = vsel %vm596, %v589, %v593
    %v598 = vand.u32 2147483647, %v418
    %vm599 = vcmp.eq.f32.partialorder %v598, 8.507059e+37
    %v600 = vand.u32 %v418, 2147483648
    %v601 = vor.u32 1.1754944e-38, %v600
    %v602 = vsel %vm599, %v601, %v597
    %v603 = vrcp.pop %v425
    %v604 = vmul.f32 %v425, %v603
    %v605 = vsub.f32 1.0, %v604
    %v606 = vmul.f32 %v603, %v605
    %v607 = vadd.f32 %v603, %v606
    %vm608 = vweird.f32 %v425
    %vm609 = vweird.f32 %v603
    %vm610 = vmor %vm608, %vm609
    %v611 = vsel %vm610, %v603, %v607
    %v612 = vand.u32 2147483647, %v425
    %vm613 = vcmp.eq.f32.partialorder %v612, 8.507059e+37
    %v614 = vand.u32 %v425, 2147483648
    %v615 = vor.u32 1.1754944e-38, %v614
    %v616 = vsel %vm613, %v615, %v611
    %v617 = vrcp.pop %v432
    %v618 = vmul.f32 %v432, %v617
    %v619 = vsub.f32 1.0, %v618
    %v620 = vmul.f32 %v617, %v619
    %v621 = vadd.f32 %v617, %v620
    %vm622 = vweird.f32 %v432
    %vm623 = vweird.f32 %v617
    %vm624 = vmor %vm622, %vm623
    %v625 = vsel %vm624, %v617, %v621
    %v626 = vand.u32 2147483647, %v432
    %vm627 = vcmp.eq.f32.partialorder %v626, 8.507059e+37
    %v628 = vand.u32 %v432, 2147483648
    %v629 = vor.u32 1.1754944e-38, %v628
    %v630 = vsel %vm627, %v629, %v625
    %v631 = vrcp.pop %v439
    %v632 = vmul.f32 %v439, %v631
    %v633 = vsub.f32 1.0, %v632
    %v634 = vmul.f32 %v631, %v633
    %v635 = vadd.f32 %v631, %v634
    %vm636 = vweird.f32 %v439
    %vm637 = vweird.f32 %v631
    %vm638 = vmor %vm636, %vm637
    %v639 = vsel %vm638, %v631, %v635
    %v640 = vand.u32 2147483647, %v439
    %vm641 = vcmp.eq.f32.partialorder %v640, 8.507059e+37
    %v642 = vand.u32 %v439, 2147483648
    %v643 = vor.u32 1.1754944e-38, %v642
    %v644 = vsel %vm641, %v643, %v639
    %v645 = vrcp.pop %v446
    %v646 = vmul.f32 %v446, %v645
    %v647 = vsub.f32 1.0, %v646
    %v648 = vmul.f32 %v645, %v647
    %v649 = vadd.f32 %v645, %v648
    %vm650 = vweird.f32 %v446
    %vm651 = vweird.f32 %v645
    %vm652 = vmor %vm650, %vm651
    %v653 = vsel %vm652, %v645, %v649
    %v654 = vand.u32 2147483647, %v446
    %vm655 = vcmp.eq.f32.partialorder %v654, 8.507059e+37
    %v656 = vand.u32 %v446, 2147483648
    %v657 = vor.u32 1.1754944e-38, %v656
    %v658 = vsel %vm655, %v657, %v653
    %v659 = vrcp.pop %v453
    %v660 = vmul.f32 %v453, %v659
    %v661 = vsub.f32 1.0, %v660
    %v662 = vmul.f32 %v659, %v661
    %v663 = vadd.f32 %v659, %v662
    %vm664 = vweird.f32 %v453
    %vm665 = vweird.f32 %v659
    %vm666 = vmor %vm664, %vm665
    %v667 = vsel %vm666, %v659, %v663
    %v668 = vand.u32 2147483647, %v453
    %vm669 = vcmp.eq.f32.partialorder %v668, 8.507059e+37
    %v670 = vand.u32 %v453, 2147483648
    %v671 = vor.u32 1.1754944e-38, %v670
    %v672 = vsel %vm669, %v671, %v667
    %v673 = vrcp.pop %v460
    %v674 = vmul.f32 %v460, %v673
    %v675 = vsub.f32 1.0, %v674
    %v676 = vmul.f32 %v673, %v675
    %v677 = vadd.f32 %v673, %v676
    %vm678 = vweird.f32 %v460
    %vm679 = vweird.f32 %v673
    %vm680 = vmor %vm678, %vm679
    %v681 = vsel %vm680, %v673, %v677
    %v682 = vand.u32 2147483647, %v460
    %vm683 = vcmp.eq.f32.partialorder %v682, 8.507059e+37
    %v684 = vand.u32 %v460, 2147483648
    %v685 = vor.u32 1.1754944e-38, %v684
    %v686 = vsel %vm683, %v685, %v681
    %v687 = vrcp.pop %v467
    %v688 = vmul.f32 %v467, %v687
    %v689 = vsub.f32 1.0, %v688
    %v690 = vmul.f32 %v687, %v689
    %v691 = vadd.f32 %v687, %v690
    %vm692 = vweird.f32 %v467
    %vm693 = vweird.f32 %v687
    %vm694 = vmor %vm692, %vm693
    %v695 = vsel %vm694, %v687, %v691
    %v696 = vand.u32 2147483647, %v467
    %vm697 = vcmp.eq.f32.partialorder %v696, 8.507059e+37
    %v698 = vand.u32 %v467, 2147483648
    %v699 = vor.u32 1.1754944e-38, %v698
    %v700 = vsel %vm697, %v699, %v695
    %v701 = vrcp.pop %v474
    %v702 = vmul.f32 %v474, %v701
    %v703 = vsub.f32 1.0, %v702
    %v704 = vmul.f32 %v701, %v703
    %v705 = vadd.f32 %v701, %v704
    %vm706 = vweird.f32 %v474
    %vm707 = vweird.f32 %v701
    %vm708 = vmor %vm706, %vm707
    %v709 = vsel %vm708, %v701, %v705
    %v710 = vand.u32 2147483647, %v474
    %vm711 = vcmp.eq.f32.partialorder %v710, 8.507059e+37
    %v712 = vand.u32 %v474, 2147483648
    %v713 = vor.u32 1.1754944e-38, %v712
    %v714 = vsel %vm711, %v713, %v709
    %v715 = vsel %vm475, %v504, 0.0
    %v716 = vsel %vm476, %v518, 0.0
    %v717 = vsel %vm477, %v532, 0.0
    %v718 = vsel %vm478, %v546, 0.0
    %v719 = vsel %vm479, %v560, 0.0
    %v720 = vsel %vm480, %v574, 0.0
    %v721 = vsel %vm481, %v588, 0.0
    %v722 = vsel %vm482, %v602, 0.0
    %v723 = vsel %vm483, %v616, 0.0
    %v724 = vsel %vm484, %v630, 0.0
    %v725 = vsel %vm485, %v644, 0.0
    %v726 = vsel %vm486, %v658, 0.0
    %v727 = vsel %vm487, %v672, 0.0
    %v728 = vsel %vm488, %v686, 0.0
    %v729 = vsel %vm489, %v700, 0.0
    %v730 = vsel %vm490, %v714, 0.0
    %v731 = vmul.f32 %v332, %v715
    %v732 = vmul.f32 %v334, %v716
    %v733 = vmul.f32 %v336, %v717
    %v734 = vmul.f32 %v338, %v718
    %v735 = vmul.f32 %v340, %v719
    %v736 = vmul.f32 %v342, %v720
    %v737 = vmul.f32 %v344, %v721
    %v738 = vmul.f32 %v346, %v722
    %v739 = vmul.f32 %v348, %v723
    %v740 = vmul.f32 %v350, %v724
    %v741 = vmul.f32 %v352, %v725
    %v742 = vmul.f32 %v354, %v726
    %v743 = vmul.f32 %v356, %v727
    %v744 = vmul.f32 %v358, %v728
    %v745 = vmul.f32 %v360, %v729
    %v746 = vmul.f32 %v362, %v730
    %748 = vset.pattern.permute.xlu0 0
    %749 = vperm.xlu0 %748, %v731
    %v750 = vpop.permute.xlu0 %749
    %753 = vset.pattern.permute.xlu0 0
    %754 = vperm.xlu0 %753, %v732
    %v755 = vpop.permute.xlu0 %754
    %758 = vset.pattern.permute.xlu0 0
    %759 = vperm.xlu0 %758, %v733
    %v760 = vpop.permute.xlu0 %759
    %763 = vset.pattern.permute.xlu0 0
    %764 = vperm.xlu0 %763, %v734
    %v765 = vpop.permute.xlu0 %764
    %768 = vset.pattern.permute.xlu0 0
    %769 = vperm.xlu0 %768, %v735
    %v770 = vpop.permute.xlu0 %769
    %773 = vset.pattern.permute.xlu0 0
    %774 = vperm.xlu0 %773, %v736
    %v775 = vpop.permute.xlu0 %774
    %778 = vset.pattern.permute.xlu0 0
    %779 = vperm.xlu0 %778, %v737
    %v780 = vpop.permute.xlu0 %779
    %783 = vset.pattern.permute.xlu0 0
    %784 = vperm.xlu0 %783, %v738
    %v785 = vpop.permute.xlu0 %784
    %788 = vset.pattern.permute.xlu0 0
    %789 = vperm.xlu0 %788, %v739
    %v790 = vpop.permute.xlu0 %789
    %793 = vset.pattern.permute.xlu0 0
    %794 = vperm.xlu0 %793, %v740
    %v795 = vpop.permute.xlu0 %794
    %798 = vset.pattern.permute.xlu0 0
    %799 = vperm.xlu0 %798, %v741
    %v800 = vpop.permute.xlu0 %799
    %803 = vset.pattern.permute.xlu0 0
    %804 = vperm.xlu0 %803, %v742
    %v805 = vpop.permute.xlu0 %804
    %808 = vset.pattern.permute.xlu0 0
    %809 = vperm.xlu0 %808, %v743
    %v810 = vpop.permute.xlu0 %809
    %813 = vset.pattern.permute.xlu0 0
    %814 = vperm.xlu0 %813, %v744
    %v815 = vpop.permute.xlu0 %814
    %818 = vset.pattern.permute.xlu0 0
    %819 = vperm.xlu0 %818, %v745
    %v820 = vpop.permute.xlu0 %819
    %823 = vset.pattern.permute.xlu0 0
    %824 = vperm.xlu0 %823, %v746
    %v825 = vpop.permute.xlu0 %824
    %v827 = vmul.f32 %v750, %v37
    %v828 = vmul.f32 %v755, %v38
    %v829 = vmul.f32 %v760, %v39
    %v830 = vmul.f32 %v765, %v40
    %v831 = vmul.f32 %v770, %v41
    %v832 = vmul.f32 %v775, %v42
    %v833 = vmul.f32 %v780, %v43
    %v834 = vmul.f32 %v785, %v44
    %v835 = vmul.f32 %v790, %v45
    %v836 = vmul.f32 %v795, %v46
    %v837 = vmul.f32 %v800, %v47
    %v838 = vmul.f32 %v805, %v48
    %v839 = vmul.f32 %v810, %v49
    %v840 = vmul.f32 %v815, %v50
    %v841 = vmul.f32 %v820, %v51
    %v842 = vmul.f32 %v825, %v52
    %v843 = vsel %vm73, %v827, 0.0
    %v844 = vrot.slane %v843, 4
    %v845 = vadd.f32 %v843, %v844
    %v846 = vrot.slane %v845, 2
    %v847 = vadd.f32 %v845, %v846
    %v848 = vrot.slane %v847, 1
    %v849 = vadd.f32 %v847, %v848
    %v850 = vsel %vm73, %v828, 0.0
    %v851 = vrot.slane %v850, 4
    %v852 = vadd.f32 %v850, %v851
    %v853 = vrot.slane %v852, 2
    %v854 = vadd.f32 %v852, %v853
    %v855 = vrot.slane %v854, 1
    %v856 = vadd.f32 %v854, %v855
    %v857 = vsel %vm73, %v829, 0.0
    %v858 = vrot.slane %v857, 4
    %v859 = vadd.f32 %v857, %v858
    %v860 = vrot.slane %v859, 2
    %v861 = vadd.f32 %v859, %v860
    %v862 = vrot.slane %v861, 1
    %v863 = vadd.f32 %v861, %v862
    %v864 = vsel %vm73, %v830, 0.0
    %v865 = vrot.slane %v864, 4
    %v866 = vadd.f32 %v864, %v865
    %v867 = vrot.slane %v866, 2
    %v868 = vadd.f32 %v866, %v867
    %v869 = vrot.slane %v868, 1
    %v870 = vadd.f32 %v868, %v869
    %v871 = vsel %vm73, %v831, 0.0
    %v872 = vrot.slane %v871, 4
    %v873 = vadd.f32 %v871, %v872
    %v874 = vrot.slane %v873, 2
    %v875 = vadd.f32 %v873, %v874
    %v876 = vrot.slane %v875, 1
    %v877 = vadd.f32 %v875, %v876
    %v878 = vsel %vm73, %v832, 0.0
    %v879 = vrot.slane %v878, 4
    %v880 = vadd.f32 %v878, %v879
    %v881 = vrot.slane %v880, 2
    %v882 = vadd.f32 %v880, %v881
    %v883 = vrot.slane %v882, 1
    %v884 = vadd.f32 %v882, %v883
    %v885 = vsel %vm73, %v833, 0.0
    %v886 = vrot.slane %v885, 4
    %v887 = vadd.f32 %v885, %v886
    %v888 = vrot.slane %v887, 2
    %v889 = vadd.f32 %v887, %v888
    %v890 = vrot.slane %v889, 1
    %v891 = vadd.f32 %v889, %v890
    %v892 = vsel %vm73, %v834, 0.0
    %v893 = vrot.slane %v892, 4
    %v894 = vadd.f32 %v892, %v893
    %v895 = vrot.slane %v894, 2
    %v896 = vadd.f32 %v894, %v895
    %v897 = vrot.slane %v896, 1
    %v898 = vadd.f32 %v896, %v897
    %v899 = vsel %vm73, %v835, 0.0
    %v900 = vrot.slane %v899, 4
    %v901 = vadd.f32 %v899, %v900
    %v902 = vrot.slane %v901, 2
    %v903 = vadd.f32 %v901, %v902
    %v904 = vrot.slane %v903, 1
    %v905 = vadd.f32 %v903, %v904
    %v906 = vsel %vm73, %v836, 0.0
    %v907 = vrot.slane %v906, 4
    %v908 = vadd.f32 %v906, %v907
    %v909 = vrot.slane %v908, 2
    %v910 = vadd.f32 %v908, %v909
    %v911 = vrot.slane %v910, 1
    %v912 = vadd.f32 %v910, %v911
    %v913 = vsel %vm73, %v837, 0.0
    %v914 = vrot.slane %v913, 4
    %v915 = vadd.f32 %v913, %v914
    %v916 = vrot.slane %v915, 2
    %v917 = vadd.f32 %v915, %v916
    %v918 = vrot.slane %v917, 1
    %v919 = vadd.f32 %v917, %v918
    %v920 = vsel %vm73, %v838, 0.0
    %v921 = vrot.slane %v920, 4
    %v922 = vadd.f32 %v920, %v921
    %v923 = vrot.slane %v922, 2
    %v924 = vadd.f32 %v922, %v923
    %v925 = vrot.slane %v924, 1
    %v926 = vadd.f32 %v924, %v925
    %v927 = vsel %vm73, %v839, 0.0
    %v928 = vrot.slane %v927, 4
    %v929 = vadd.f32 %v927, %v928
    %v930 = vrot.slane %v929, 2
    %v931 = vadd.f32 %v929, %v930
    %v932 = vrot.slane %v931, 1
    %v933 = vadd.f32 %v931, %v932
    %v934 = vsel %vm73, %v840, 0.0
    %v935 = vrot.slane %v934, 4
    %v936 = vadd.f32 %v934, %v935
    %v937 = vrot.slane %v936, 2
    %v938 = vadd.f32 %v936, %v937
    %v939 = vrot.slane %v938, 1
    %v940 = vadd.f32 %v938, %v939
    %v941 = vsel %vm73, %v841, 0.0
    %v942 = vrot.slane %v941, 4
    %v943 = vadd.f32 %v941, %v942
    %v944 = vrot.slane %v943, 2
    %v945 = vadd.f32 %v943, %v944
    %v946 = vrot.slane %v945, 1
    %v947 = vadd.f32 %v945, %v946
    %v948 = vsel %vm73, %v842, 0.0
    %v949 = vrot.slane %v948, 4
    %v950 = vadd.f32 %v948, %v949
    %v951 = vrot.slane %v950, 2
    %v952 = vadd.f32 %v950, %v951
    %v953 = vrot.slane %v952, 1
    %v954 = vadd.f32 %v952, %v953
    %v955 = vsel %vm475, 1.0, 0.0
    %v956 = vsel %vm476, 1.0, 0.0
    %v957 = vsel %vm477, 1.0, 0.0
    %v958 = vsel %vm478, 1.0, 0.0
    %v959 = vsel %vm479, 1.0, 0.0
    %v960 = vsel %vm480, 1.0, 0.0
    %v961 = vsel %vm481, 1.0, 0.0
    %v962 = vsel %vm482, 1.0, 0.0
    %v963 = vsel %vm483, 1.0, 0.0
    %v964 = vsel %vm484, 1.0, 0.0
    %v965 = vsel %vm485, 1.0, 0.0
    %v966 = vsel %vm486, 1.0, 0.0
    %v967 = vsel %vm487, 1.0, 0.0
    %v968 = vsel %vm488, 1.0, 0.0
    %v969 = vsel %vm489, 1.0, 0.0
    %v970 = vsel %vm490, 1.0, 0.0
    %v971 = vld [vmem:[#allocation2] sm:$0xff]
    %v972 = vld [vmem:[#allocation2 + $0x8] sm:$0xff]
    %v973 = vld [vmem:[#allocation2 + $0x10] sm:$0xff]
    %v974 = vld [vmem:[#allocation2 + $0x18] sm:$0xff]
    %v975 = vld [vmem:[%s4] sm:$0x1]
    %v977 = vperm.slane %v975, 0
    %980 = vset.pattern.permute.xlu0 0
    %981 = vperm.xlu0 %980, %v955
    %v982 = vpop.permute.xlu0 %981
    %984 = vset.pattern.permute.xlu0 0
    %985 = vperm.xlu0 %984, %v956
    %v986 = vpop.permute.xlu0 %985
    %988 = vset.pattern.permute.xlu0 0
    %989 = vperm.xlu0 %988, %v957
    %v990 = vpop.permute.xlu0 %989
    %992 = vset.pattern.permute.xlu0 0
    %993 = vperm.xlu0 %992, %v958
    %v994 = vpop.permute.xlu0 %993
    %996 = vset.pattern.permute.xlu0 0
    %997 = vperm.xlu0 %996, %v959
    %v998 = vpop.permute.xlu0 %997
    %1000 = vset.pattern.permute.xlu0 0
    %1001 = vperm.xlu0 %1000, %v960
    %v1002 = vpop.permute.xlu0 %1001
    %1004 = vset.pattern.permute.xlu0 0
    %1005 = vperm.xlu0 %1004, %v961
    %v1006 = vpop.permute.xlu0 %1005
    %1008 = vset.pattern.permute.xlu0 0
    %1009 = vperm.xlu0 %1008, %v962
    %v1010 = vpop.permute.xlu0 %1009
    %1012 = vset.pattern.permute.xlu0 0
    %1013 = vperm.xlu0 %1012, %v963
    %v1014 = vpop.permute.xlu0 %1013
    %1016 = vset.pattern.permute.xlu0 0
    %1017 = vperm.xlu0 %1016, %v964
    %v1018 = vpop.permute.xlu0 %1017
    %1020 = vset.pattern.permute.xlu0 0
    %1021 = vperm.xlu0 %1020, %v965
    %v1022 = vpop.permute.xlu0 %1021
    %1024 = vset.pattern.permute.xlu0 0
    %1025 = vperm.xlu0 %1024, %v966
    %v1026 = vpop.permute.xlu0 %1025
    %1028 = vset.pattern.permute.xlu0 0
    %1029 = vperm.xlu0 %1028, %v967
    %v1030 = vpop.permute.xlu0 %1029
    %1032 = vset.pattern.permute.xlu0 0
    %1033 = vperm.xlu0 %1032, %v968
    %v1034 = vpop.permute.xlu0 %1033
    %1036 = vset.pattern.permute.xlu0 0
    %1037 = vperm.xlu0 %1036, %v969
    %v1038 = vpop.permute.xlu0 %1037
    %1040 = vset.pattern.permute.xlu0 0
    %1041 = vperm.xlu0 %1040, %v970
    %v1042 = vpop.permute.xlu0 %1041
    %vm1043 = vcmask 1041409
    %v1044 = vsel %vm1043, %v986, %v982
    %vm1045 = vcmask 1042434
    %v1046 = vsel %vm1045, %v990, %v1044
    %vm1047 = vcmask 1043459
    %v1048 = vsel %vm1047, %v994, %v1046
    %vm1049 = vcmask 1044484
    %v1050 = vsel %vm1049, %v998, %v1048
    %vm1051 = vcmask 1045509
    %v1052 = vsel %vm1051, %v1002, %v1050
    %vm1053 = vcmask 1046534
    %v1054 = vsel %vm1053, %v1006, %v1052
    %vm1055 = vcmask 1047559
    %v1056 = vsel %vm1055, %v1010, %v1054
    %v1057 = vsel %vm1043, %v1018, %v1014
    %v1058 = vsel %vm1045, %v1022, %v1057
    %v1059 = vsel %vm1047, %v1026, %v1058
    %v1060 = vsel %vm1049, %v1030, %v1059
    %v1061 = vsel %vm1051, %v1034, %v1060
    %v1062 = vsel %vm1053, %v1038, %v1061
    %v1063 = vsel %vm1055, %v1042, %v1062
    %v1066 = vmul.f32 %v977, %v1056
    %v1067 = vmul.f32 %v977, %v1063
    %v1084 = vsel %vm1043, %v856, %v849
    %v1085 = vsel %vm1045, %v863, %v1084
    %v1086 = vsel %vm1047, %v870, %v1085
    %v1087 = vsel %vm1049, %v877, %v1086
    %v1088 = vsel %vm1051, %v884, %v1087
    %v1089 = vsel %vm1053, %v891, %v1088
    %v1090 = vsel %vm1055, %v898, %v1089
    %v1091 = vsel %vm1043, %v912, %v905
    %v1092 = vsel %vm1045, %v919, %v1091
    %v1093 = vsel %vm1047, %v926, %v1092
    %v1094 = vsel %vm1049, %v933, %v1093
    %v1095 = vsel %vm1051, %v940, %v1094
    %v1096 = vsel %vm1053, %v947, %v1095
    %v1097 = vsel %vm1055, %v954, %v1096
    %v1098 = vsel %vm73, %v1090, 0
    %v1100 = vsel %vm73, %v1097, 0
    %1102 = vmatpush.msra.mxu0 0.0
    %1103 = vmatpush.msra.mxu0 0.0
    %1104 = vmatpush.msra.mxu0 0.0
    %1105 = vmatpush.msra.mxu0 0.0
    %1106 = vmatpush.msra.mxu0 0.0
    %1107 = vmatpush.msra.mxu0 0.0
    %1108 = vmatpush.msra.mxu0 0.0
    %1109 = vmatpush.msra.mxu0 0.0
    %1110 = vmatpush.msra.mxu0 0.0
    %1111 = vmatpush.msra.mxu0 0.0
    %1112 = vmatpush.msra.mxu0 0.0
    %1113 = vmatpush.msra.mxu0 0.0
    %1114 = vmatpush.msra.mxu0 %v974
    %1115 = vmatpush.msra.mxu0 %v973
    %1116 = vmatpush.msra.mxu0 %v972
    %1117 = vmatpush.msra.mxu0 %v971
    %1118 = vmatmul.f32.gmra.mxu0 %v1098
    %v1119 = vpop.f32.mrf.mxu0
    %v1120 = vadd.f32 %v1066, %v1119
    %1121 = vmatmul.f32.gmra.mxu0 %v1100
    %v1122 = vpop.f32.mrf.mxu0
    %v1123 = vadd.f32 %v1067, %v1122
    %1124 = vdwg.mxu0
    %1125 = vst.msk [vmem:[#allocation5] sm:$0xff] %vm73, %v1120
    %1126 = vst.msk [vmem:[#allocation5 + $0x8] sm:$0xff] %vm73, %v1123
    // Predicated region
    $region26: #{tpu_custom_call.1} parent=1 // pred_check
      _
    $region27: #{tpu_custom_call.1} parent=1 // pred_check_branch
      %1128 = sbr.rel (0) target = $region29
    $region28: #{tpu_custom_call.1} parent=1 // pred_region
      %1130 = vsyncadd [#allocation4], 0
      %s1131 = sshll.u32 [#allocation5], 4
      %s1132 = int_to_ptr.vmem [resolvable:$true] %s1131
      %s1133 = sshll.u32 %s5, 4
      %s1134 = int_to_ptr.hbm [resolvable:$true] %s1133
      %1139 = dma.vmem_to_hbm [thread:$0]  %s1132, 256, %s1134, [#allocation4], 128, 128, 8
    $region29: #{tpu_custom_call.1} parent=1 // pred_fallthru
      _
    // Predicated region
    $region30: #{tpu_custom_call.1} parent=1 // pred_check
      _
    $region31: #{tpu_custom_call.1} parent=1 // pred_check_branch
      %1141 = sbr.rel (0) target = $region33
    $region32: #{tpu_custom_call.1} parent=1 // pred_region
      %1143 = dma.done [#allocation4], 256
    $region33: #{tpu_custom_call.1} parent=1 // pred_fallthru
      _
    %1144 = vsyncpa [#allocation3], 1
    %1145 = vsyncpa [#allocation4], 1

</llo_original>
